<compile_context>
chip_gen: v6e
topology: v6e:2x2x1
jax: 0.10.0
libtpu: 0.0.40
codegen_flags: <defaults>
</compile_context>

<pallas_src>
import jax
import jax.numpy as jnp
from jax.experimental import pallas as pl
from jax.experimental.pallas import tpu as pltpu


# ----------------------------------------------------------------------------
# One-time feature probes (run tiny kernels at import; never fail the script).
# ----------------------------------------------------------------------------
def _feature_probe(fn):
    try:
        jax.block_until_ready(fn())
        return True
    except Exception:
        return False


def _probe_f16_out():
    def k(x_ref, o_ref):
        o_ref[...] = x_ref[...].astype(jnp.float16)

    return pl.pallas_call(
        k, out_shape=jax.ShapeDtypeStruct((16, 128), jnp.float16)
    )(jnp.zeros((16, 128), jnp.float32))


def _probe_buffered():
    def k(x_ref, o_ref):
        o_ref[...] = x_ref[...] * 2.0

    spec = pl.BlockSpec((16, 128), lambda i: (i, 0),
                        pipeline_mode=pl.Buffered(3))
    return pl.pallas_call(
        k,
        out_shape=jax.ShapeDtypeStruct((64, 128), jnp.float32),
        grid=(4,),
        in_specs=[spec],
        out_specs=pl.BlockSpec((16, 128), lambda i: (i, 0)),
    )(jnp.zeros((64, 128), jnp.float32))


_F16_OUT_OK = _feature_probe(_probe_f16_out)
_BUFFERED_OK = _feature_probe(_probe_buffered)


# ----------------------------------------------------------------------------
# Pallas kernels: y = x @ W^T + b  (x resident, weight streamed over N [, K]).
# ----------------------------------------------------------------------------
def _mlp_kernel_single(x_ref, w_ref, b_ref, o_ref):
    # Single reduction step (tk == K): no scratch, no pl.when gates.
    acc = jnp.dot(x_ref[...], w_ref[...], preferred_element_type=jnp.float32)
    o_ref[...] = (acc + b_ref[...]).astype(o_ref.dtype)


def _mlp_kernel_multi(x_ref, w_ref, b_ref, o_ref, acc_ref):
    k = pl.program_id(1)

    @pl.when(k == 0)
    def _():
        # Fold the bias into the accumulator init (saves the epilogue add).
        acc_ref[...] = jnp.broadcast_to(b_ref[...], acc_ref.shape)

    acc_ref[...] += jnp.dot(
        x_ref[...], w_ref[...], preferred_element_type=jnp.float32
    )

    @pl.when(k == pl.num_programs(1) - 1)
    def _():
        o_ref[...] = acc_ref[...].astype(o_ref.dtype)


def _weight_spec(block_shape, index_map, bufs):
    if bufs > 2:
        try:
            return pl.BlockSpec(block_shape, index_map,
                                pipeline_mode=pl.Buffered(bufs))
        except Exception:
            pass
    return pl.BlockSpec(block_shape, index_map)


def _pick_tiles(M_pad, K, N, out_bytes, vmem_budget):
    # tn: wide (lane-dense stores, contiguous-ish weight DMA rows), capped at
    # 1024, but keep >= 2 steps on the parallel N axis for v7x's 2 TCs.
    tn = min(1024, N)
    if N >= 256:
        tn = min(tn, N // 2)
    while tn > 128 and (N % tn != 0 or tn % 128 != 0):
        tn -= 128
    tn = max(tn, 128)
    assert N % tn == 0

    def footprint(tk, w_bufs, n_k):
        x_b = 2 * M_pad * tk * 2            # bf16 activations (double-buffered)
        w_b = w_bufs * tk * tn * 2          # bf16 weight tiles (pipelined)
        b_b = 2 * tn * 4                    # f32 bias tile
        o_b = 2 * M_pad * tn * out_bytes    # output tiles
        a_b = M_pad * tn * 4 if n_k > 1 else 0   # f32 accumulator scratch
        return x_b + w_b + b_b + o_b + a_b

    # tk: largest divisor of K (multiple of 128) whose pipelined footprint fits.
    tk = 128
    for cand in range(K, 127, -128):
        if K % cand != 0:
            continue
        if footprint(cand, 2, K // cand) <= vmem_budget:
            tk = cand
            break
    assert K % tk == 0

    n_k, n_n = K // tk, N // tn
    w_bufs = 2
    if _BUFFERED_OK and n_n * n_k >= 3 and footprint(tk, 3, n_k) <= vmem_budget:
        w_bufs = 3
    return tn, tk, w_bufs


def mlp_linear(x_bf16, w_t_bf16, bias_f32):
    """y = x @ w_t + bias.

    x_bf16:   (M, K) bfloat16  -- compressed hidden states
    w_t_bf16: (K, N) bfloat16  -- Linear weight, pre-transposed + cast ONCE
    bias_f32: (N,)   float32
    returns   (M, N) float16 (or float32 if f16 stores unsupported)
    """
    M, K = x_bf16.shape
    K2, N = w_t_bf16.shape
    assert K == K2
    assert K % 128 == 0 and N % 128 == 0

    out_dtype = jnp.float16 if _F16_OUT_OK else jnp.float32
    out_bytes = 2 if _F16_OUT_OK else 4

    # bf16 packs 16 sublanes per vreg -> pad M to a multiple of 16.
    M_pad = max(16, ((M + 15) // 16) * 16)
    if M_pad != M:
        x_bf16 = jnp.pad(x_bf16, ((0, M_pad - M), (0, 0)))

    vmem_budget = 40 * 1024 * 1024   # headroom under the 48 MiB scoped limit
    tn, tk, w_bufs = _pick_tiles(M_pad, K, N, out_bytes, vmem_budget)
    n_n, n_k = N // tn, K // tk

    bias2d = bias_f32.reshape(1, N).astype(jnp.float32)

    if n_k == 1:
        kernel = _mlp_kernel_single
        grid = (n_n,)
        in_specs = [
            # x block index is constant -> DMA'd exactly once, resident.
            pl.BlockSpec((M_pad, K), lambda j: (0, 0)),
            _weight_spec((K, tn), lambda j: (0, j), w_bufs),
            pl.BlockSpec((1, tn), lambda j: (0, j)),
        ]
        out_specs = pl.BlockSpec((M_pad, tn), lambda j: (0, j))
        scratch_shapes = []
        dims = ("parallel",)
    else:
        kernel = _mlp_kernel_multi
        grid = (n_n, n_k)   # reduction axis innermost
        in_specs = [
            pl.BlockSpec((M_pad, tk), lambda j, k: (0, k)),
            _weight_spec((tk, tn), lambda j, k: (k, j), w_bufs),
            pl.BlockSpec((1, tn), lambda j, k: (0, j)),
        ]
        out_specs = pl.BlockSpec((M_pad, tn), lambda j, k: (0, j))
        scratch_shapes = [pltpu.VMEM((M_pad, tn), jnp.float32)]
        dims = ("parallel", "arbitrary")

    out = pl.pallas_call(
        kernel,
        out_shape=jax.ShapeDtypeStruct((M_pad, N), out_dtype),
        grid_spec=pltpu.PrefetchScalarGridSpec(
            num_scalar_prefetch=0,
            grid=grid,
            in_specs=in_specs,
            out_specs=out_specs,
            scratch_shapes=scratch_shapes,
        ),
        compiler_params=pltpu.CompilerParams(
            dimension_semantics=dims,
            vmem_limit_bytes=48 * 1024 * 1024,
        ),
    )(x_bf16, w_t_bf16, bias2d)

    return out[:M] if M_pad != M else out


# ----------------------------------------------------------------------------
# ModelModule.forward equivalent (JAX glue around the Pallas hot path).
# ----------------------------------------------------------------------------
def model_module_forward(
    ori_hidden_states,   # (B, S, H) float16 -- stands in for LlamaModel output
    input_ids,           # (B, S) int32
    attention_mask,      # (B, S) int32
    pad_token_id,        # int (static)
    w_t_bf16,            # (H, H) bfloat16 -- W^T, prepared ONCE at load time
    mlp_bias_f32,        # (H,)   float32
    n_cprsed_per_batch,  # int (static): number of compressed positions / row
):
    # TODO(synk): the LlamaForCausalLM backbone (hidden-state pass, loss and
    # generate) is a pretrained transformer with no standalone Pallas
    # equivalent; ori_hidden_states stands in for its last_hidden_state.
    B, S, H = ori_hidden_states.shape

    # cprsed_postion = (input_ids == pad_token_id) & (attention_mask == 1)
    cprsed_position = (input_ids == pad_token_id) & (attention_mask == 1)

    # oriHiddenStates[cprsed_postion, ...].view(B, -1, H)
    # (assumes exactly n_cprsed_per_batch pad positions per batch row, which is
    #  also what PyTorch's .view(B, -1, H) requires to be well-formed)
    M = B * n_cprsed_per_batch
    flat_mask = cprsed_position.reshape(-1)
    flat_hidden = ori_hidden_states.reshape(B * S, H)
    (row_idx,) = jnp.nonzero(flat_mask, size=M)          # static-size gather
    cprsed = flat_hidden[row_idx]                        # (M, H) float16

    # self.__mlp(cprsedHiddenStates.float()).half()  -- hot path in Pallas.
    x_bf16 = cprsed.astype(jnp.bfloat16)
    y = mlp_linear(x_bf16, w_t_bf16, mlp_bias_f32)       # f16 (or f32 fallback)
    cprsed_embeds = y.astype(jnp.float16).reshape(B, n_cprsed_per_batch, H)

    # TODO(synk): c_inputs['cprsed_embeds'] = cprsed_embeds would be fed back
    # into the Llama causal-LM for the cross-entropy loss; not translatable.
    return cprsed_embeds


if __name__ == "__main__":
    key = jax.random.PRNGKey(0)
    k_hid, k_ids, k_w, k_b = jax.random.split(key, 4)

    # Small shapes consistent with the module (Linear is square H x H; the
    # real module uses 4096, we test at H=512).
    B, S, H = 2, 16, 512
    PAD_ID = 0
    N_CPRSED = 4          # compressed (pad) positions per batch row

    # Synthetic stand-in for the Llama backbone's last_hidden_state (half()).
    ori_hidden_states = jax.random.normal(k_hid, (B, S, H), dtype=jnp.float32)
    ori_hidden_states = ori_hidden_states.astype(jnp.float16)

    # input_ids with pad_token_id at fixed positions; attention_mask all ones.
    input_ids = jax.random.randint(k_ids, (B, S), 1, 100, dtype=jnp.int32)
    input_ids = input_ids.at[:, 4:4 + N_CPRSED].set(PAD_ID)
    attention_mask = jnp.ones((B, S), dtype=jnp.int32)

    # Deterministic nn.Linear(H, H) init (PyTorch-style uniform bound).
    bound = 1.0 / (H ** 0.5)
    mlp_weight = jax.random.uniform(k_w, (H, H), jnp.float32, -bound, bound)
    mlp_bias = jax.random.uniform(k_b, (H,), jnp.float32, -bound, bound)

    # One-time parameter preparation (hoisted out of the per-call forward):
    # cache W^T in bf16 and the bias in f32 as "parameters".
    w_t_bf16 = jnp.asarray(mlp_weight.T, dtype=jnp.bfloat16)
    bias_f32 = jnp.asarray(mlp_bias, dtype=jnp.float32)

    fwd = jax.jit(model_module_forward, static_argnums=(3, 6))
    out = fwd(ori_hidden_states, input_ids, attention_mask, PAD_ID,
              w_t_bf16, bias_f32, N_CPRSED)
    out = jax.block_until_ready(out)

    # Reference check (pure JAX, full f32) for the Pallas hot path.
    mask = (input_ids == PAD_ID) & (attention_mask == 1)
    (ridx,) = jnp.nonzero(mask.reshape(-1), size=B * N_CPRSED)
    ref_x = ori_hidden_states.reshape(B * S, H)[ridx].astype(jnp.float32)
    ref = (ref_x @ mlp_weight.T + mlp_bias).astype(jnp.float16)
    ref = ref.reshape(B, N_CPRSED, H)
    assert out.shape == (B, N_CPRSED, H) and out.dtype == jnp.float16
    # bf16 inputs + f32 accumulation: slightly looser tolerance than pure f32.
    assert jnp.allclose(out.astype(jnp.float32), ref.astype(jnp.float32),
                        atol=3e-2, rtol=3e-2)

    print("KERNEL_OK")
</pallas_src>

<mosaic_0001>
module attributes {stable_mosaic.version = 11 : i64} {
  func.func @k(%arg0: memref<16x128xf32, #tpu.memory_space<vmem>>, %arg1: memref<16x128xf16, #tpu.memory_space<vmem>>) attributes {dimension_semantics = [], scalar_prefetch = 0 : i64, scratch_operands = 0 : i64, tpu.core_type = #tpu.core_type<tc>} {
    %c0 = arith.constant 0 : index
    %c0_0 = arith.constant 0 : index
    %0 = vector.load %arg0[%c0, %c0_0] : memref<16x128xf32, #tpu.memory_space<vmem>>, vector<16x128xf32>
    %1 = arith.truncf %0 : vector<16x128xf32> to vector<16x128xf16>
    %c0_1 = arith.constant 0 : index
    %c0_2 = arith.constant 0 : index
    %2 = vector.load %arg1[%c0_1, %c0_2] : memref<16x128xf16, #tpu.memory_space<vmem>>, vector<16x128xf16>
    tpu.vector_store %arg1[%c0_1, %c0_2], %1 {strides = array<i32>} : memref<16x128xf16, #tpu.memory_space<vmem>>, vector<16x128xf16>,
    return
  }
}

module attributes {stable_mosaic.version = 11 : i64} {
  func.func private @main(%arg0: i32) attributes {dimension_semantics = [#tpu.dimension_semantics<core_parallel>], iteration_bounds = array<i64: 2>, tpu.core_type = #tpu.core_type<sc_scalar_subcore>, window_params = []} {
    return
  }
}

module attributes {stable_mosaic.version = 11 : i64} {
  func.func private @main(%arg0: i32) attributes {dimension_semantics = [#tpu.dimension_semantics<core_parallel>], iteration_bounds = array<i64: 2>, tpu.core_type = #tpu.core_type<sc_scalar_subcore>, window_params = []} {
    return
  }
}

module attributes {stable_mosaic.version = 11 : i64} {
  func.func @_mlp_kernel_single(%arg0: i32, %arg1: memref<16x512xbf16, #tpu.memory_space<vmem>>, %arg2: memref<512x256xbf16, #tpu.memory_space<vmem>>, %arg3: memref<1x256xf32, #tpu.memory_space<vmem>>, %arg4: memref<16x256xf32, #tpu.memory_space<vmem>>) attributes {dimension_semantics = [#tpu.dimension_semantics<parallel>], iteration_bounds = array<i64: 2>, scalar_prefetch = 0 : i64, scratch_operands = 0 : i64, tpu.core_type = #tpu.core_type<tc>, window_params = [{pipeline_mode = #tpu.pipeline_mode<synchronous>, transform_indices = @transform_0, window_bounds = array<i64: 16, 512>}, {transform_indices = @transform_1, window_bounds = array<i64: 512, 256>}, {transform_indices = @transform_2, window_bounds = array<i64: 1, 256>}, {transform_indices = @transform_3, window_bounds = array<i64: 16, 256>}]} {
    %c0 = arith.constant 0 : index
    %c0_0 = arith.constant 0 : index
    %0 = vector.load %arg1[%c0, %c0_0] : memref<16x512xbf16, #tpu.memory_space<vmem>>, vector<16x512xbf16>
    %c0_1 = arith.constant 0 : index
    %c0_2 = arith.constant 0 : index
    %1 = vector.load %arg2[%c0_1, %c0_2] : memref<512x256xbf16, #tpu.memory_space<vmem>>, vector<512x256xbf16>
    %cst = arith.constant dense<0.000000e+00> : vector<16x256xf32>
    %2 = tpu.matmul %0, %1, %cst {dimension_numbers = #tpu.dot_dimension_numbers<[1], [0], [0], [1], [0, 0, 1, 1], [], []>} : vector<16x512xbf16>, vector<512x256xbf16>, vector<16x256xf32> -> vector<16x256xf32>
    %c0_3 = arith.constant 0 : index
    %c0_4 = arith.constant 0 : index
    %3 = vector.load %arg3[%c0_3, %c0_4] : memref<1x256xf32, #tpu.memory_space<vmem>>, vector<1x256xf32>
    %4 = vector.broadcast %3 : vector<1x256xf32> to vector<16x256xf32>
    %5 = arith.addf %2, %4 : vector<16x256xf32>
    %c0_5 = arith.constant 0 : index
    %c0_6 = arith.constant 0 : index
    %6 = vector.load %arg4[%c0_5, %c0_6] : memref<16x256xf32, #tpu.memory_space<vmem>>, vector<16x256xf32>
    tpu.vector_store %arg4[%c0_5, %c0_6], %5 {strides = array<i32>} : memref<16x256xf32, #tpu.memory_space<vmem>>, vector<16x256xf32>,
    return
  }
  func.func @transform_0(%arg0: i32) -> (i32, i32) {
    %c0_i32 = arith.constant 0 : i32
    %c0_i32_0 = arith.constant 0 : i32
    %c0_i32_1 = arith.constant 0 : i32
    return %c0_i32, %c0_i32_0 : i32, i32
  }
  func.func @transform_1(%arg0: i32) -> (i32, i32) {
    %c0_i32 = arith.constant 0 : i32
    %c0_i32_0 = arith.constant 0 : i32
    return %c0_i32, %arg0 : i32, i32
  }
  func.func @transform_2(%arg0: i32) -> (i32, i32) {
    %c0_i32 = arith.constant 0 : i32
    %c0_i32_0 = arith.constant 0 : i32
    return %c0_i32, %arg0 : i32, i32
  }
  func.func @transform_3(%arg0: i32) -> (i32, i32) {
    %c0_i32 = arith.constant 0 : i32
    %c0_i32_0 = arith.constant 0 : i32
    return %c0_i32, %arg0 : i32, i32
  }
}

</mosaic_0001>

<llo_original>
// kernel: model_module_forward.1
$region0: #{model_module_forward.1}
  #allocation0 [shape = 'u32[]', space=smem, size = 0x4, offset = 0x4, fixed_abs, tag = 'smem constant byte address 0x4 - core index']
  #allocation1 [shape = 'u32[144,128]{1,0:T(1,128)}', space=vmem, size = 0x12000, scoped, tag = 'internal scratch']
  %s0 = inlined_call_operand.vmem [shape: bf16[16,512], index: 0, kind: input, shape index: {}]
  %s1 = inlined_call_operand.vmem [shape: bf16[512,512], index: 1, kind: input, shape index: {}]
  %s2 = inlined_call_operand.vmem [shape: f32[1,512], index: 2, kind: input, shape index: {}]
  %s3 = inlined_call_operand.vmem [shape: f32[16,512], index: 3, kind: output, shape index: {}]
  %s4 = sld [smem:[#allocation0]]
  $region102: #{model_module_forward.1} parent=0
    _
  %s6 = ssub.s32 1, %s4
  %s7 = scalar_select 0, %s6, %s4
  $region1: #{model_module_forward.1} parent=0
    #allocation2 [shape = 'u8[524288]{0}', space=vmem, size = 0x80000, scoped, tag = 'input window, operand 1']
    #allocation3 [shape = 'u8[32768]{0}', space=vmem, size = 0x8000, scoped, tag = 'output window, operand 0']
    loop: start=0, step=1, limit=4
    $region2: #{model_module_forward.1} parent=1 // loop_pre_header
      _
    $region3: #{model_module_forward.1} parent=1 // loop_header
      %s9 = sphi 0, %s13
      %p10 = scmp.ge.s32.totalorder %s9, 4
      %s17 = sphi 0, %s17
      %s19 = sphi 0, %s17
      %s20 = sphi 0, %s19
      %s34 = sphi 0, %s20
      %s40 = sphi 0, %s42
      %s43 = sphi 0, %s40
      %s44 = sphi 0, %s43
      %s60 = sphi 0, %s44
      %s66 = sphi 0, %s68
      %s69 = sphi 0, %s66
      %s70 = sphi 0, %s69
      %s86 = sphi 0, %s70
      %s92 = sphi 0, %s94
      %s95 = sphi 0, %s92
      %s96 = sphi 0, %s95
      %s112 = sphi 0, %s96
    $region4: #{model_module_forward.1} parent=1 // loop_header_branch
      %12 = sbr.rel (%p10) target = $region8
    $region5: #{model_module_forward.1} parent=1 // loop_body
      %s14 = ssub.s32 %s9, 1
      %s15 = ssub.s32 %s9, 2
      %s16 = sadd.s32 %s9, 1
      %s18 = sadd.s32 %s17, 1
      %p21 = scmp.eq.s32.totalorder %s9, 1
      %p22 = scmp.ne.s32.totalorder %s17, %s19
      %p23 = scmp.eq.s32.totalorder %s9, 0
      %p24 = por %p22, %p23
      %p25 = scmp.ne.s32.totalorder %s17, %s19
      %p26 = scmp.eq.s32.totalorder %s14, 1
      %p27 = por %p25, %p26
      %p28 = scmp.ne.s32.totalorder %s19, %s20
      %p29 = scmp.eq.s32.totalorder %s14, 0
      %p30 = por %p28, %p29
      %p31 = scmp.ne.s32.totalorder %s19, %s20
      %p32 = scmp.eq.s32.totalorder %s15, 1
      %p33 = por %p31, %p32
      %p35 = scmp.ne.s32.totalorder %s20, %s34
      %p36 = scmp.eq.s32.totalorder %s15, 0
      %p37 = por %p35, %p36
      %s38 = ssub.s32 %s9, %s16
      %p39 = scmp.eq.s32.totalorder %s38, 0
      %s41 = sadd.s32 %s40, 1
      %s42 = scalar_select %p39, %s40, %s41
      %p45 = pneg %p39
      %p46 = scmp.eq.s32.totalorder %s9, 1
      %p47 = por %p45, %p46
      %p48 = scmp.ne.s32.totalorder %s40, %s43
      %p49 = scmp.eq.s32.totalorder %s9, 0
      %p50 = por %p48, %p49
      %p51 = scmp.ne.s32.totalorder %s40, %s43
      %p52 = scmp.eq.s32.totalorder %s14, 1
      %p53 = por %p51, %p52
      %p54 = scmp.ne.s32.totalorder %s43, %s44
      %p55 = scmp.eq.s32.totalorder %s14, 0
      %p56 = por %p54, %p55
      %p57 = scmp.ne.s32.totalorder %s43, %s44
      %p58 = scmp.eq.s32.totalorder %s15, 1
      %p59 = por %p57, %p58
      %p61 = scmp.ne.s32.totalorder %s44, %s60
      %p62 = scmp.eq.s32.totalorder %s15, 0
      %p63 = por %p61, %p62
      %s64 = ssub.s32 %s9, %s16
      %p65 = scmp.eq.s32.totalorder %s64, 0
      %s67 = sadd.s32 %s66, 1
      %s68 = scalar_select %p65, %s66, %s67
      %p71 = pneg %p65
      %p72 = scmp.eq.s32.totalorder %s9, 1
      %p73 = por %p71, %p72
      %p74 = scmp.ne.s32.totalorder %s66, %s69
      %p75 = scmp.eq.s32.totalorder %s9, 0
      %p76 = por %p74, %p75
      %p77 = scmp.ne.s32.totalorder %s66, %s69
      %p78 = scmp.eq.s32.totalorder %s14, 1
      %p79 = por %p77, %p78
      %p80 = scmp.ne.s32.totalorder %s69, %s70
      %p81 = scmp.eq.s32.totalorder %s14, 0
      %p82 = por %p80, %p81
      %p83 = scmp.ne.s32.totalorder %s69, %s70
      %p84 = scmp.eq.s32.totalorder %s15, 1
      %p85 = por %p83, %p84
      %p87 = scmp.ne.s32.totalorder %s70, %s86
      %p88 = scmp.eq.s32.totalorder %s15, 0
      %p89 = por %p87, %p88
      %s90 = ssub.s32 %s9, %s16
      %p91 = scmp.eq.s32.totalorder %s90, 0
      %s93 = sadd.s32 %s92, 1
      %s94 = scalar_select %p91, %s92, %s93
      %p97 = pneg %p91
      %p98 = scmp.eq.s32.totalorder %s9, 1
      %p99 = por %p97, %p98
      %p100 = scmp.ne.s32.totalorder %s92, %s95
      %p101 = scmp.eq.s32.totalorder %s9, 0
      %p102 = por %p100, %p101
      %p103 = scmp.ne.s32.totalorder %s92, %s95
      %p104 = scmp.eq.s32.totalorder %s14, 1
      %p105 = por %p103, %p104
      %p106 = scmp.ne.s32.totalorder %s95, %s96
      %p107 = scmp.eq.s32.totalorder %s14, 0
      %p108 = por %p106, %p107
      %p109 = scmp.ne.s32.totalorder %s95, %s96
      %p110 = scmp.eq.s32.totalorder %s15, 1
      %p111 = por %p109, %p110
      %p113 = scmp.ne.s32.totalorder %s96, %s112
      %p114 = scmp.eq.s32.totalorder %s15, 0
      %p115 = por %p113, %p114
      %p116 = scmp.le.s32.totalorder 1, %s9
      %p117 = scmp.lt.s32.totalorder %s9, 3
      %p118 = pnand %p116, %p117
      %p119 = pneg %p118
      // Predicated region
      $region9: #{model_module_forward.1} parent=5 // pred_check
        _
      $region10: #{model_module_forward.1} parent=5 // pred_check_branch
        %121 = sbr.rel (%p118) target = $region12
      $region11: #{model_module_forward.1} parent=5 // pred_region
        %s122 = ssub.s32 %s9, 1
        // Predicated region
        $region13: #{model_module_forward.1} parent=11 // pred_check
          %p123 = pneg %p30
        $region14: #{model_module_forward.1} parent=11 // pred_check_branch
          %125 = sbr.rel (%p123) target = $region16
        $region15: #{model_module_forward.1} parent=11 // pred_region
          _
        $region16: #{model_module_forward.1} parent=11 // pred_fallthru
          _
      $region12: #{model_module_forward.1} parent=5 // pred_fallthru
        _
      %p126 = scmp.lt.s32.totalorder %s9, 2
      // Predicated region
      $region17: #{model_module_forward.1} parent=5 // pred_check
        %p127 = pneg %p126
      $region18: #{model_module_forward.1} parent=5 // pred_check_branch
        %129 = sbr.rel (%p127) target = $region20
      $region19: #{model_module_forward.1} parent=5 // pred_region
        // Predicated region
        $region21: #{model_module_forward.1} parent=19 // pred_check
          %p130 = pneg %p50
        $region22: #{model_module_forward.1} parent=19 // pred_check_branch
          %132 = sbr.rel (%p130) target = $region24
        $region23: #{model_module_forward.1} parent=19 // pred_region
          %s133 = sand.u32 %s40, 1
          %s134 = sand.u32 %s40, 1
          %s135 = smul.addr %s134, 512
          %s136 = scalar_lea.vmem [#allocation2], %s135
          %s137 = smul.u32 2, %s9
          %s138 = smul.addr %s137, 4
          %s139 = scalar_lea.vmem %s1, %s138
          // Predicated region
          $region25: #{model_module_forward.1} parent=23 // pred_check
            _
          $region26: #{model_module_forward.1} parent=23 // pred_check_branch
            %141 = sbr.rel (0) target = $region28
          $region27: #{model_module_forward.1} parent=23 // pred_region
            // Predicated region
            $region29: #{model_module_forward.1} parent=27 // pred_check
              _
            $region30: #{model_module_forward.1} parent=27 // pred_check_branch
              %143 = sbr.rel (0) target = $region32
            $region31: #{model_module_forward.1} parent=27 // pred_region
              // Predicated region
              $region44: #{model_module_forward.1} parent=31 // pred_check
                _
              $region45: #{model_module_forward.1} parent=31 // pred_check_branch
                %285 = sbr.rel (0) target = $region47
              $region46: #{model_module_forward.1} parent=31 // pred_region
                loop: start=0, step=1, limit=1
                $region48: #{model_module_forward.1} parent=46 // loop_pre_header
                  _
                $region49: #{model_module_forward.1} parent=46 // loop_header
                  %s287 = sphi 0, %s291
                  %p288 = scmp.ge.s32.totalorder %s287, 1
                  %s292 = sphi %s139, %s139
                  %s293 = sphi %s136, %s136
                $region50: #{model_module_forward.1} parent=46 // loop_header_branch
                  %290 = sbr.rel (%p288) target = $region54
                $region51: #{model_module_forward.1} parent=46 // loop_body
                  %v294 = vld [vmem:[%s292] sm:$0xff]
                  %295 = vst [vmem:[%s293] sm:$0xff] %v294
                  %v296 = vld [vmem:[%s292 + $0x10] sm:$0xff]
                  %297 = vst [vmem:[%s293 + $0x8] sm:$0xff] %v296
                  %v298 = vld [vmem:[%s292 + $0x20] sm:$0xff]
                  %299 = vst [vmem:[%s293 + $0x10] sm:$0xff] %v298
                  %v300 = vld [vmem:[%s292 + $0x30] sm:$0xff]
                  %301 = vst [vmem:[%s293 + $0x18] sm:$0xff] %v300
                  %v302 = vld [vmem:[%s292 + $0x40] sm:$0xff]
                  %303 = vst [vmem:[%s293 + $0x20] sm:$0xff] %v302
                  %v304 = vld [vmem:[%s292 + $0x50] sm:$0xff]
                  %305 = vst [vmem:[%s293 + $0x28] sm:$0xff] %v304
                  %v306 = vld [vmem:[%s292 + $0x60] sm:$0xff]
                  %307 = vst [vmem:[%s293 + $0x30] sm:$0xff] %v306
                  %v308 = vld [vmem:[%s292 + $0x70] sm:$0xff]
                  %309 = vst [vmem:[%s293 + $0x38] sm:$0xff] %v308
                  %v310 = vld [vmem:[%s292 + $0x80] sm:$0xff]
                  %311 = vst [vmem:[%s293 + $0x40] sm:$0xff] %v310
                  %v312 = vld [vmem:[%s292 + $0x90] sm:$0xff]
                  %313 = vst [vmem:[%s293 + $0x48] sm:$0xff] %v312
                  %v314 = vld [vmem:[%s292 + $0xa0] sm:$0xff]
                  %315 = vst [vmem:[%s293 + $0x50] sm:$0xff] %v314
                  %v316 = vld [vmem:[%s292 + $0xb0] sm:$0xff]
                  %317 = vst [vmem:[%s293 + $0x58] sm:$0xff] %v316
                  %v318 = vld [vmem:[%s292 + $0xc0] sm:$0xff]
                  %319 = vst [vmem:[%s293 + $0x60] sm:$0xff] %v318
                  %v320 = vld [vmem:[%s292 + $0xd0] sm:$0xff]
                  %321 = vst [vmem:[%s293 + $0x68] sm:$0xff] %v320
                  %v322 = vld [vmem:[%s292 + $0xe0] sm:$0xff]
                  %323 = vst [vmem:[%s293 + $0x70] sm:$0xff] %v322
                  %v324 = vld [vmem:[%s292 + $0xf0] sm:$0xff]
                  %325 = vst [vmem:[%s293 + $0x78] sm:$0xff] %v324
                  %v326 = vld [vmem:[%s292 + $0x100] sm:$0xff]
                  %327 = vst [vmem:[%s293 + $0x80] sm:$0xff] %v326
                  %v328 = vld [vmem:[%s292 + $0x110] sm:$0xff]
                  %329 = vst [vmem:[%s293 + $0x88] sm:$0xff] %v328
                  %v330 = vld [vmem:[%s292 + $0x120] sm:$0xff]
                  %331 = vst [vmem:[%s293 + $0x90] sm:$0xff] %v330
                  %v332 = vld [vmem:[%s292 + $0x130] sm:$0xff]
                  %333 = vst [vmem:[%s293 + $0x98] sm:$0xff] %v332
                  %v334 = vld [vmem:[%s292 + $0x140] sm:$0xff]
                  %335 = vst [vmem:[%s293 + $0xa0] sm:$0xff] %v334
                  %v336 = vld [vmem:[%s292 + $0x150] sm:$0xff]
                  %337 = vst [vmem:[%s293 + $0xa8] sm:$0xff] %v336
                  %v338 = vld [vmem:[%s292 + $0x160] sm:$0xff]
                  %339 = vst [vmem:[%s293 + $0xb0] sm:$0xff] %v338
                  %v340 = vld [vmem:[%s292 + $0x170] sm:$0xff]
                  %341 = vst [vmem:[%s293 + $0xb8] sm:$0xff] %v340
                  %v342 = vld [vmem:[%s292 + $0x180] sm:$0xff]
                  %343 = vst [vmem:[%s293 + $0xc0] sm:$0xff] %v342
                  %v344 = vld [vmem:[%s292 + $0x190] sm:$0xff]
                  %345 = vst [vmem:[%s293 + $0xc8] sm:$0xff] %v344
                  %v346 = vld [vmem:[%s292 + $0x1a0] sm:$0xff]
                  %347 = vst [vmem:[%s293 + $0xd0] sm:$0xff] %v346
                  %v348 = vld [vmem:[%s292 + $0x1b0] sm:$0xff]
                  %349 = vst [vmem:[%s293 + $0xd8] sm:$0xff] %v348
                  %v350 = vld [vmem:[%s292 + $0x1c0] sm:$0xff]
                  %351 = vst [vmem:[%s293 + $0xe0] sm:$0xff] %v350
                  %v352 = vld [vmem:[%s292 + $0x1d0] sm:$0xff]
                  %353 = vst [vmem:[%s293 + $0xe8] sm:$0xff] %v352
                  %v354 = vld [vmem:[%s292 + $0x1e0] sm:$0xff]
                  %355 = vst [vmem:[%s293 + $0xf0] sm:$0xff] %v354
                  %v356 = vld [vmem:[%s292 + $0x1f0] sm:$0xff]
                  %357 = vst [vmem:[%s293 + $0xf8] sm:$0xff] %v356
                  %v358 = vld [vmem:[%s292 + $0x200] sm:$0xff]
                  %359 = vst [vmem:[%s293 + $0x100] sm:$0xff] %v358
                  %v360 = vld [vmem:[%s292 + $0x210] sm:$0xff]
                  %361 = vst [vmem:[%s293 + $0x108] sm:$0xff] %v360
                  %v362 = vld [vmem:[%s292 + $0x220] sm:$0xff]
                  %363 = vst [vmem:[%s293 + $0x110] sm:$0xff] %v362
                  %v364 = vld [vmem:[%s292 + $0x230] sm:$0xff]
                  %365 = vst [vmem:[%s293 + $0x118] sm:$0xff] %v364
                  %v366 = vld [vmem:[%s292 + $0x240] sm:$0xff]
                  %367 = vst [vmem:[%s293 + $0x120] sm:$0xff] %v366
                  %v368 = vld [vmem:[%s292 + $0x250] sm:$0xff]
                  %369 = vst [vmem:[%s293 + $0x128] sm:$0xff] %v368
                  %v370 = vld [vmem:[%s292 + $0x260] sm:$0xff]
                  %371 = vst [vmem:[%s293 + $0x130] sm:$0xff] %v370
                  %v372 = vld [vmem:[%s292 + $0x270] sm:$0xff]
                  %373 = vst [vmem:[%s293 + $0x138] sm:$0xff] %v372
                  %v374 = vld [vmem:[%s292 + $0x280] sm:$0xff]
                  %375 = vst [vmem:[%s293 + $0x140] sm:$0xff] %v374
                  %v376 = vld [vmem:[%s292 + $0x290] sm:$0xff]
                  %377 = vst [vmem:[%s293 + $0x148] sm:$0xff] %v376
                  %v378 = vld [vmem:[%s292 + $0x2a0] sm:$0xff]
                  %379 = vst [vmem:[%s293 + $0x150] sm:$0xff] %v378
                  %v380 = vld [vmem:[%s292 + $0x2b0] sm:$0xff]
                  %381 = vst [vmem:[%s293 + $0x158] sm:$0xff] %v380
                  %v382 = vld [vmem:[%s292 + $0x2c0] sm:$0xff]
                  %383 = vst [vmem:[%s293 + $0x160] sm:$0xff] %v382
                  %v384 = vld [vmem:[%s292 + $0x2d0] sm:$0xff]
                  %385 = vst [vmem:[%s293 + $0x168] sm:$0xff] %v384
                  %v386 = vld [vmem:[%s292 + $0x2e0] sm:$0xff]
                  %387 = vst [vmem:[%s293 + $0x170] sm:$0xff] %v386
                  %v388 = vld [vmem:[%s292 + $0x2f0] sm:$0xff]
                  %389 = vst [vmem:[%s293 + $0x178] sm:$0xff] %v388
                  %v390 = vld [vmem:[%s292 + $0x300] sm:$0xff]
                  %391 = vst [vmem:[%s293 + $0x180] sm:$0xff] %v390
                  %v392 = vld [vmem:[%s292 + $0x310] sm:$0xff]
                  %393 = vst [vmem:[%s293 + $0x188] sm:$0xff] %v392
                  %v394 = vld [vmem:[%s292 + $0x320] sm:$0xff]
                  %395 = vst [vmem:[%s293 + $0x190] sm:$0xff] %v394
                  %v396 = vld [vmem:[%s292 + $0x330] sm:$0xff]
                  %397 = vst [vmem:[%s293 + $0x198] sm:$0xff] %v396
                  %v398 = vld [vmem:[%s292 + $0x340] sm:$0xff]
                  %399 = vst [vmem:[%s293 + $0x1a0] sm:$0xff] %v398
                  %v400 = vld [vmem:[%s292 + $0x350] sm:$0xff]
                  %401 = vst [vmem:[%s293 + $0x1a8] sm:$0xff] %v400
                  %v402 = vld [vmem:[%s292 + $0x360] sm:$0xff]
                  %403 = vst [vmem:[%s293 + $0x1b0] sm:$0xff] %v402
                  %v404 = vld [vmem:[%s292 + $0x370] sm:$0xff]
                  %405 = vst [vmem:[%s293 + $0x1b8] sm:$0xff] %v404
                  %v406 = vld [vmem:[%s292 + $0x380] sm:$0xff]
                  %407 = vst [vmem:[%s293 + $0x1c0] sm:$0xff] %v406
                  %v408 = vld [vmem:[%s292 + $0x390] sm:$0xff]
                  %409 = vst [vmem:[%s293 + $0x1c8] sm:$0xff] %v408
                  %v410 = vld [vmem:[%s292 + $0x3a0] sm:$0xff]
                  %411 = vst [vmem:[%s293 + $0x1d0] sm:$0xff] %v410
                  %v412 = vld [vmem:[%s292 + $0x3b0] sm:$0xff]
                  %413 = vst [vmem:[%s293 + $0x1d8] sm:$0xff] %v412
                  %v414 = vld [vmem:[%s292 + $0x3c0] sm:$0xff]
                  %415 = vst [vmem:[%s293 + $0x1e0] sm:$0xff] %v414
                  %v416 = vld [vmem:[%s292 + $0x3d0] sm:$0xff]
                  %417 = vst [vmem:[%s293 + $0x1e8] sm:$0xff] %v416
                  %v418 = vld [vmem:[%s292 + $0x3e0] sm:$0xff]
                  %419 = vst [vmem:[%s293 + $0x1f0] sm:$0xff] %v418
                  %v420 = vld [vmem:[%s292 + $0x3f0] sm:$0xff]
                  %421 = vst [vmem:[%s293 + $0x1f8] sm:$0xff] %v420
                $region52: #{model_module_forward.1} parent=46 // loop_footer
                  %s291 = sadd.s32 1, %s287
                $region53: #{model_module_forward.1} parent=46 // loop_footer_branch
                  %286 = sbr.rel target = $region49
                $region54: #{model_module_forward.1} parent=46 // loop_exit
                  _
              $region47: #{model_module_forward.1} parent=31 // pred_fallthru
                _
              // Predicated region
              $region55: #{model_module_forward.1} parent=31 // pred_check
                _
              $region56: #{model_module_forward.1} parent=31 // pred_check_branch
                %423 = sbr.rel target = $region58
              $region57: #{model_module_forward.1} parent=31 // pred_region
                _
              $region58: #{model_module_forward.1} parent=31 // pred_fallthru
                _
            $region32: #{model_module_forward.1} parent=27 // pred_fallthru
              _
            // Predicated region
            $region33: #{model_module_forward.1} parent=27 // pred_check
              _
            $region34: #{model_module_forward.1} parent=27 // pred_check_branch
              %145 = sbr.rel target = $region36
            $region35: #{model_module_forward.1} parent=27 // pred_region
              %s147 = ssub.s32 256, 1
              loop: start=0, step=1, limit=1
              $region37: #{model_module_forward.1} parent=35 // loop_pre_header
                _
              $region38: #{model_module_forward.1} parent=35 // loop_header
                %s149 = sphi 0, %s153
                %p150 = scmp.ge.s32.totalorder %s149, 1
                %s154 = sphi %s139, %s139
                %s155 = sphi %s136, %s136
              $region39: #{model_module_forward.1} parent=35 // loop_header_branch
                %152 = sbr.rel (%p150) target = $region43
              $region40: #{model_module_forward.1} parent=35 // loop_body
                %v156 = vld [vmem:[%s154] sm:%s147]
                %157 = vst [vmem:[%s155] sm:%s147] %v156
                %v158 = vld [vmem:[%s154 + $0x10] sm:%s147]
                %159 = vst [vmem:[%s155 + $0x8] sm:%s147] %v158
                %v160 = vld [vmem:[%s154 + $0x20] sm:%s147]
                %161 = vst [vmem:[%s155 + $0x10] sm:%s147] %v160
                %v162 = vld [vmem:[%s154 + $0x30] sm:%s147]
                %163 = vst [vmem:[%s155 + $0x18] sm:%s147] %v162
                %v164 = vld [vmem:[%s154 + $0x40] sm:%s147]
                %165 = vst [vmem:[%s155 + $0x20] sm:%s147] %v164
                %v166 = vld [vmem:[%s154 + $0x50] sm:%s147]
                %167 = vst [vmem:[%s155 + $0x28] sm:%s147] %v166
                %v168 = vld [vmem:[%s154 + $0x60] sm:%s147]
                %169 = vst [vmem:[%s155 + $0x30] sm:%s147] %v168
                %v170 = vld [vmem:[%s154 + $0x70] sm:%s147]
                %171 = vst [vmem:[%s155 + $0x38] sm:%s147] %v170
                %v172 = vld [vmem:[%s154 + $0x80] sm:%s147]
                %173 = vst [vmem:[%s155 + $0x40] sm:%s147] %v172
                %v174 = vld [vmem:[%s154 + $0x90] sm:%s147]
                %175 = vst [vmem:[%s155 + $0x48] sm:%s147] %v174
                %v176 = vld [vmem:[%s154 + $0xa0] sm:%s147]
                %177 = vst [vmem:[%s155 + $0x50] sm:%s147] %v176
                %v178 = vld [vmem:[%s154 + $0xb0] sm:%s147]
                %179 = vst [vmem:[%s155 + $0x58] sm:%s147] %v178
                %v180 = vld [vmem:[%s154 + $0xc0] sm:%s147]
                %181 = vst [vmem:[%s155 + $0x60] sm:%s147] %v180
                %v182 = vld [vmem:[%s154 + $0xd0] sm:%s147]
                %183 = vst [vmem:[%s155 + $0x68] sm:%s147] %v182
                %v184 = vld [vmem:[%s154 + $0xe0] sm:%s147]
                %185 = vst [vmem:[%s155 + $0x70] sm:%s147] %v184
                %v186 = vld [vmem:[%s154 + $0xf0] sm:%s147]
                %187 = vst [vmem:[%s155 + $0x78] sm:%s147] %v186
                %v188 = vld [vmem:[%s154 + $0x100] sm:%s147]
                %189 = vst [vmem:[%s155 + $0x80] sm:%s147] %v188
                %v190 = vld [vmem:[%s154 + $0x110] sm:%s147]
                %191 = vst [vmem:[%s155 + $0x88] sm:%s147] %v190
                %v192 = vld [vmem:[%s154 + $0x120] sm:%s147]
                %193 = vst [vmem:[%s155 + $0x90] sm:%s147] %v192
                %v194 = vld [vmem:[%s154 + $0x130] sm:%s147]
                %195 = vst [vmem:[%s155 + $0x98] sm:%s147] %v194
                %v196 = vld [vmem:[%s154 + $0x140] sm:%s147]
                %197 = vst [vmem:[%s155 + $0xa0] sm:%s147] %v196
                %v198 = vld [vmem:[%s154 + $0x150] sm:%s147]
                %199 = vst [vmem:[%s155 + $0xa8] sm:%s147] %v198
                %v200 = vld [vmem:[%s154 + $0x160] sm:%s147]
                %201 = vst [vmem:[%s155 + $0xb0] sm:%s147] %v200
                %v202 = vld [vmem:[%s154 + $0x170] sm:%s147]
                %203 = vst [vmem:[%s155 + $0xb8] sm:%s147] %v202
                %v204 = vld [vmem:[%s154 + $0x180] sm:%s147]
                %205 = vst [vmem:[%s155 + $0xc0] sm:%s147] %v204
                %v206 = vld [vmem:[%s154 + $0x190] sm:%s147]
                %207 = vst [vmem:[%s155 + $0xc8] sm:%s147] %v206
                %v208 = vld [vmem:[%s154 + $0x1a0] sm:%s147]
                %209 = vst [vmem:[%s155 + $0xd0] sm:%s147] %v208
                %v210 = vld [vmem:[%s154 + $0x1b0] sm:%s147]
                %211 = vst [vmem:[%s155 + $0xd8] sm:%s147] %v210
                %v212 = vld [vmem:[%s154 + $0x1c0] sm:%s147]
                %213 = vst [vmem:[%s155 + $0xe0] sm:%s147] %v212
                %v214 = vld [vmem:[%s154 + $0x1d0] sm:%s147]
                %215 = vst [vmem:[%s155 + $0xe8] sm:%s147] %v214
                %v216 = vld [vmem:[%s154 + $0x1e0] sm:%s147]
                %217 = vst [vmem:[%s155 + $0xf0] sm:%s147] %v216
                %v218 = vld [vmem:[%s154 + $0x1f0] sm:%s147]
                %219 = vst [vmem:[%s155 + $0xf8] sm:%s147] %v218
                %v220 = vld [vmem:[%s154 + $0x200] sm:%s147]
                %221 = vst [vmem:[%s155 + $0x100] sm:%s147] %v220
                %v222 = vld [vmem:[%s154 + $0x210] sm:%s147]
                %223 = vst [vmem:[%s155 + $0x108] sm:%s147] %v222
                %v224 = vld [vmem:[%s154 + $0x220] sm:%s147]
                %225 = vst [vmem:[%s155 + $0x110] sm:%s147] %v224
                %v226 = vld [vmem:[%s154 + $0x230] sm:%s147]
                %227 = vst [vmem:[%s155 + $0x118] sm:%s147] %v226
                %v228 = vld [vmem:[%s154 + $0x240] sm:%s147]
                %229 = vst [vmem:[%s155 + $0x120] sm:%s147] %v228
                %v230 = vld [vmem:[%s154 + $0x250] sm:%s147]
                %231 = vst [vmem:[%s155 + $0x128] sm:%s147] %v230
                %v232 = vld [vmem:[%s154 + $0x260] sm:%s147]
                %233 = vst [vmem:[%s155 + $0x130] sm:%s147] %v232
                %v234 = vld [vmem:[%s154 + $0x270] sm:%s147]
                %235 = vst [vmem:[%s155 + $0x138] sm:%s147] %v234
                %v236 = vld [vmem:[%s154 + $0x280] sm:%s147]
                %237 = vst [vmem:[%s155 + $0x140] sm:%s147] %v236
                %v238 = vld [vmem:[%s154 + $0x290] sm:%s147]
                %239 = vst [vmem:[%s155 + $0x148] sm:%s147] %v238
                %v240 = vld [vmem:[%s154 + $0x2a0] sm:%s147]
                %241 = vst [vmem:[%s155 + $0x150] sm:%s147] %v240
                %v242 = vld [vmem:[%s154 + $0x2b0] sm:%s147]
                %243 = vst [vmem:[%s155 + $0x158] sm:%s147] %v242
                %v244 = vld [vmem:[%s154 + $0x2c0] sm:%s147]
                %245 = vst [vmem:[%s155 + $0x160] sm:%s147] %v244
                %v246 = vld [vmem:[%s154 + $0x2d0] sm:%s147]
                %247 = vst [vmem:[%s155 + $0x168] sm:%s147] %v246
                %v248 = vld [vmem:[%s154 + $0x2e0] sm:%s147]
                %249 = vst [vmem:[%s155 + $0x170] sm:%s147] %v248
                %v250 = vld [vmem:[%s154 + $0x2f0] sm:%s147]
                %251 = vst [vmem:[%s155 + $0x178] sm:%s147] %v250
                %v252 = vld [vmem:[%s154 + $0x300] sm:%s147]
                %253 = vst [vmem:[%s155 + $0x180] sm:%s147] %v252
                %v254 = vld [vmem:[%s154 + $0x310] sm:%s147]
                %255 = vst [vmem:[%s155 + $0x188] sm:%s147] %v254
                %v256 = vld [vmem:[%s154 + $0x320] sm:%s147]
                %257 = vst [vmem:[%s155 + $0x190] sm:%s147] %v256
                %v258 = vld [vmem:[%s154 + $0x330] sm:%s147]
                %259 = vst [vmem:[%s155 + $0x198] sm:%s147] %v258
                %v260 = vld [vmem:[%s154 + $0x340] sm:%s147]
                %261 = vst [vmem:[%s155 + $0x1a0] sm:%s147] %v260
                %v262 = vld [vmem:[%s154 + $0x350] sm:%s147]
                %263 = vst [vmem:[%s155 + $0x1a8] sm:%s147] %v262
                %v264 = vld [vmem:[%s154 + $0x360] sm:%s147]
                %265 = vst [vmem:[%s155 + $0x1b0] sm:%s147] %v264
                %v266 = vld [vmem:[%s154 + $0x370] sm:%s147]
                %267 = vst [vmem:[%s155 + $0x1b8] sm:%s147] %v266
                %v268 = vld [vmem:[%s154 + $0x380] sm:%s147]
                %269 = vst [vmem:[%s155 + $0x1c0] sm:%s147] %v268
                %v270 = vld [vmem:[%s154 + $0x390] sm:%s147]
                %271 = vst [vmem:[%s155 + $0x1c8] sm:%s147] %v270
                %v272 = vld [vmem:[%s154 + $0x3a0] sm:%s147]
                %273 = vst [vmem:[%s155 + $0x1d0] sm:%s147] %v272
                %v274 = vld [vmem:[%s154 + $0x3b0] sm:%s147]
                %275 = vst [vmem:[%s155 + $0x1d8] sm:%s147] %v274
                %v276 = vld [vmem:[%s154 + $0x3c0] sm:%s147]
                %277 = vst [vmem:[%s155 + $0x1e0] sm:%s147] %v276
                %v278 = vld [vmem:[%s154 + $0x3d0] sm:%s147]
                %279 = vst [vmem:[%s155 + $0x1e8] sm:%s147] %v278
                %v280 = vld [vmem:[%s154 + $0x3e0] sm:%s147]
                %281 = vst [vmem:[%s155 + $0x1f0] sm:%s147] %v280
                %v282 = vld [vmem:[%s154 + $0x3f0] sm:%s147]
                %283 = vst [vmem:[%s155 + $0x1f8] sm:%s147] %v282
              $region41: #{model_module_forward.1} parent=35 // loop_footer
                %s153 = sadd.s32 1, %s149
              $region42: #{model_module_forward.1} parent=35 // loop_footer_branch
                %148 = sbr.rel target = $region38
              $region43: #{model_module_forward.1} parent=35 // loop_exit
                _
            $region36: #{model_module_forward.1} parent=27 // pred_fallthru
              _
          $region28: #{model_module_forward.1} parent=23 // pred_fallthru
            _
          %424 = vnop
        $region24: #{model_module_forward.1} parent=19 // pred_fallthru
          _
        // Predicated region
        $region59: #{model_module_forward.1} parent=19 // pred_check
          %p425 = pneg %p76
        $region60: #{model_module_forward.1} parent=19 // pred_check_branch
          %427 = sbr.rel (%p425) target = $region62
        $region61: #{model_module_forward.1} parent=19 // pred_region
          %s428 = smul.u32 2, %s9
          %p429 = scmp.lt.s32.totalorder %s428, 3
          %s430 = scalar_select %p429, %s428, 3
          %s431 = scalar_lea.vmem %s2, %s430
          %s432 = smul.u32 2, %s9
        $region62: #{model_module_forward.1} parent=19 // pred_fallthru
          _
      $region20: #{model_module_forward.1} parent=5 // pred_fallthru
        _
      %p433 = scmp.le.s32.totalorder 1, %s9
      %p434 = scmp.lt.s32.totalorder %s9, 3
      %p435 = pnand %p433, %p434
      %p436 = pneg %p435
      // Predicated region
      $region63: #{model_module_forward.1} parent=5 // pred_check
        _
      $region64: #{model_module_forward.1} parent=5 // pred_check_branch
        %438 = sbr.rel (%p435) target = $region66
      $region65: #{model_module_forward.1} parent=5 // pred_region
        %s439 = ssub.s32 %s9, 1
        %s440 = sand.u32 %s43, 1
        %s441 = sand.u32 %s43, 1
        %s442 = smul.addr %s441, 512
        %s443 = scalar_lea.vmem [#allocation2], %s442
        // Predicated region
        $region67: #{model_module_forward.1} parent=65 // pred_check
          %p444 = pneg %p56
        $region68: #{model_module_forward.1} parent=65 // pred_check_branch
          %446 = sbr.rel (%p444) target = $region70
        $region69: #{model_module_forward.1} parent=65 // pred_region
          _
        $region70: #{model_module_forward.1} parent=65 // pred_fallthru
          _
        %p447 = pneg %p30
        %p448 = pneg %p27
        %s449 = sand.u32 %s43, 1
        %s450 = sand.u32 %s43, 1
        %s451 = smul.addr %s450, 512
        %s452 = scalar_lea.vmem [#allocation2], %s451
        %p453 = pneg %p56
        %p454 = pneg %p53
        %s455 = smul.u32 2, %s14
        %p456 = scmp.lt.s32.totalorder %s455, 3
        %s457 = scalar_select %p456, %s455, 3
        %s458 = scalar_lea.vmem %s2, %s457
        %p459 = pneg %p82
        %p460 = pneg %p79
        %p461 = pneg %p108
        %p462 = pneg %p105
        %s463 = sand.u32 %s95, 1
        %s464 = sand.u32 %s95, 1
        %s465 = smul.addr %s464, 32
        %s466 = scalar_lea.vmem [#allocation3], %s465
        %s467 = smul.u32 2, %s14
        %s468 = smul.u32 2, %s14
        %p469 = scmp.lt.s32.totalorder %s468, 3
        %s470 = scalar_select %p469, %s468, 3
        %s471 = scalar_lea.vmem %s2, %s470
        %s472 = smul.u32 2, %s14
        %s473 = smul.u32 2, %s14
        %v474 = vld [vmem:[%s0] sm:$0xff]
        %v475 = vld [vmem:[%s0 + $0x8] sm:$0xff]
        %v476 = vld [vmem:[%s0 + $0x10] sm:$0xff]
        %v477 = vld [vmem:[%s0 + $0x18] sm:$0xff]
        %v478 = vld [vmem:[%s443] sm:$0xff]
        %v479 = vld [vmem:[%s443 + $0x8] sm:$0xff]
        %v480 = vld [vmem:[%s443 + $0x10] sm:$0xff]
        %v481 = vld [vmem:[%s443 + $0x18] sm:$0xff]
        %v482 = vld [vmem:[%s443 + $0x20] sm:$0xff]
        %v483 = vld [vmem:[%s443 + $0x28] sm:$0xff]
        %v484 = vld [vmem:[%s443 + $0x30] sm:$0xff]
        %v485 = vld [vmem:[%s443 + $0x38] sm:$0xff]
        %v486 = vld [vmem:[%s443 + $0x40] sm:$0xff]
        %v487 = vld [vmem:[%s443 + $0x48] sm:$0xff]
        %v488 = vld [vmem:[%s443 + $0x50] sm:$0xff]
        %v489 = vld [vmem:[%s443 + $0x58] sm:$0xff]
        %v490 = vld [vmem:[%s443 + $0x60] sm:$0xff]
        %v491 = vld [vmem:[%s443 + $0x68] sm:$0xff]
        %v492 = vld [vmem:[%s443 + $0x70] sm:$0xff]
        %v493 = vld [vmem:[%s443 + $0x78] sm:$0xff]
        %v494 = vld [vmem:[%s443 + $0x80] sm:$0xff]
        %v495 = vld [vmem:[%s443 + $0x88] sm:$0xff]
        %v496 = vld [vmem:[%s443 + $0x90] sm:$0xff]
        %v497 = vld [vmem:[%s443 + $0x98] sm:$0xff]
        %v498 = vld [vmem:[%s443 + $0xa0] sm:$0xff]
        %v499 = vld [vmem:[%s443 + $0xa8] sm:$0xff]
        %v500 = vld [vmem:[%s443 + $0xb0] sm:$0xff]
        %v501 = vld [vmem:[%s443 + $0xb8] sm:$0xff]
        %v502 = vld [vmem:[%s443 + $0xc0] sm:$0xff]
        %v503 = vld [vmem:[%s443 + $0xc8] sm:$0xff]
        %v504 = vld [vmem:[%s443 + $0xd0] sm:$0xff]
        %v505 = vld [vmem:[%s443 + $0xd8] sm:$0xff]
        %v506 = vld [vmem:[%s443 + $0xe0] sm:$0xff]
        %v507 = vld [vmem:[%s443 + $0xe8] sm:$0xff]
        %v508 = vld [vmem:[%s443 + $0xf0] sm:$0xff]
        %v509 = vld [vmem:[%s443 + $0xf8] sm:$0xff]
        %v510 = vld [vmem:[%s443 + $0x100] sm:$0xff]
        %v511 = vld [vmem:[%s443 + $0x108] sm:$0xff]
        %v512 = vld [vmem:[%s443 + $0x110] sm:$0xff]
        %v513 = vld [vmem:[%s443 + $0x118] sm:$0xff]
        %v514 = vld [vmem:[%s443 + $0x120] sm:$0xff]
        %v515 = vld [vmem:[%s443 + $0x128] sm:$0xff]
        %v516 = vld [vmem:[%s443 + $0x130] sm:$0xff]
        %v517 = vld [vmem:[%s443 + $0x138] sm:$0xff]
        %v518 = vld [vmem:[%s443 + $0x140] sm:$0xff]
        %v519 = vld [vmem:[%s443 + $0x148] sm:$0xff]
        %v520 = vld [vmem:[%s443 + $0x150] sm:$0xff]
        %v521 = vld [vmem:[%s443 + $0x158] sm:$0xff]
        %v522 = vld [vmem:[%s443 + $0x160] sm:$0xff]
        %v523 = vld [vmem:[%s443 + $0x168] sm:$0xff]
        %v524 = vld [vmem:[%s443 + $0x170] sm:$0xff]
        %v525 = vld [vmem:[%s443 + $0x178] sm:$0xff]
        %v526 = vld [vmem:[%s443 + $0x180] sm:$0xff]
        %v527 = vld [vmem:[%s443 + $0x188] sm:$0xff]
        %v528 = vld [vmem:[%s443 + $0x190] sm:$0xff]
        %v529 = vld [vmem:[%s443 + $0x198] sm:$0xff]
        %v530 = vld [vmem:[%s443 + $0x1a0] sm:$0xff]
        %v531 = vld [vmem:[%s443 + $0x1a8] sm:$0xff]
        %v532 = vld [vmem:[%s443 + $0x1b0] sm:$0xff]
        %v533 = vld [vmem:[%s443 + $0x1b8] sm:$0xff]
        %v534 = vld [vmem:[%s443 + $0x1c0] sm:$0xff]
        %v535 = vld [vmem:[%s443 + $0x1c8] sm:$0xff]
        %v536 = vld [vmem:[%s443 + $0x1d0] sm:$0xff]
        %v537 = vld [vmem:[%s443 + $0x1d8] sm:$0xff]
        %v538 = vld [vmem:[%s443 + $0x1e0] sm:$0xff]
        %v539 = vld [vmem:[%s443 + $0x1e8] sm:$0xff]
        %v540 = vld [vmem:[%s443 + $0x1f0] sm:$0xff]
        %v541 = vld [vmem:[%s443 + $0x1f8] sm:$0xff]
        %v542 = vld [vmem:[%s471] sm:$0x3]
        %v544 = vlaneseq
        %v545 = vshrl.u32 %v544, 7
        %v546 = vsub.s32 0, %v545
        %v547 = vrot.slane %v542, %v546
        %v548 = vlaneseq
        %v549 = vshrl.u32 %v548, 7
        %v550 = vsub.s32 1, %v549
        %v551 = vrot.slane %v542, %v550
        %v558 = vunpack.c.l.b16 %v474
        %v559 = vunpack.c.h.b16 %v474
        %v560 = vunpack.c.l.b16 %v475
        %v561 = vunpack.c.h.b16 %v475
        %v562 = vunpack.c.l.b16 %v476
        %v563 = vunpack.c.h.b16 %v476
        %v564 = vunpack.c.l.b16 %v477
        %v565 = vunpack.c.h.b16 %v477
        %v566 = vpack.c.b16 %v562, %v558
        %v567 = vpack.c.b16 %v563, %v559
        %v568 = vpack.c.b16 %v564, %v560
        %v569 = vpack.c.b16 %v565, %v561
        %v638 = vunpack.c.l.b16 %v478
        %v639 = vunpack.c.h.b16 %v478
        %v640 = vunpack.c.l.b16 %v479
        %v641 = vunpack.c.h.b16 %v479
        %v642 = vunpack.c.l.b16 %v480
        %v643 = vunpack.c.h.b16 %v480
        %v644 = vunpack.c.l.b16 %v481
        %v645 = vunpack.c.h.b16 %v481
        %v646 = vunpack.c.l.b16 %v482
        %v647 = vunpack.c.h.b16 %v482
        %v648 = vunpack.c.l.b16 %v483
        %v649 = vunpack.c.h.b16 %v483
        %v650 = vunpack.c.l.b16 %v484
        %v651 = vunpack.c.h.b16 %v484
        %v652 = vunpack.c.l.b16 %v485
        %v653 = vunpack.c.h.b16 %v485
        %v654 = vunpack.c.l.b16 %v486
        %v655 = vunpack.c.h.b16 %v486
        %v656 = vunpack.c.l.b16 %v487
        %v657 = vunpack.c.h.b16 %v487
        %v658 = vunpack.c.l.b16 %v488
        %v659 = vunpack.c.h.b16 %v488
        %v660 = vunpack.c.l.b16 %v489
        %v661 = vunpack.c.h.b16 %v489
        %v662 = vunpack.c.l.b16 %v490
        %v663 = vunpack.c.h.b16 %v490
        %v664 = vunpack.c.l.b16 %v491
        %v665 = vunpack.c.h.b16 %v491
        %v666 = vunpack.c.l.b16 %v492
        %v667 = vunpack.c.h.b16 %v492
        %v668 = vunpack.c.l.b16 %v493
        %v669 = vunpack.c.h.b16 %v493
        %v670 = vunpack.c.l.b16 %v494
        %v671 = vunpack.c.h.b16 %v494
        %v672 = vunpack.c.l.b16 %v495
        %v673 = vunpack.c.h.b16 %v495
        %v674 = vunpack.c.l.b16 %v496
        %v675 = vunpack.c.h.b16 %v496
        %v676 = vunpack.c.l.b16 %v497
        %v677 = vunpack.c.h.b16 %v497
        %v678 = vunpack.c.l.b16 %v498
        %v679 = vunpack.c.h.b16 %v498
        %v680 = vunpack.c.l.b16 %v499
        %v681 = vunpack.c.h.b16 %v499
        %v682 = vunpack.c.l.b16 %v500
        %v683 = vunpack.c.h.b16 %v500
        %v684 = vunpack.c.l.b16 %v501
        %v685 = vunpack.c.h.b16 %v501
        %v686 = vunpack.c.l.b16 %v502
        %v687 = vunpack.c.h.b16 %v502
        %v688 = vunpack.c.l.b16 %v503
        %v689 = vunpack.c.h.b16 %v503
        %v690 = vunpack.c.l.b16 %v504
        %v691 = vunpack.c.h.b16 %v504
        %v692 = vunpack.c.l.b16 %v505
        %v693 = vunpack.c.h.b16 %v505
        %v694 = vunpack.c.l.b16 %v506
        %v695 = vunpack.c.h.b16 %v506
        %v696 = vunpack.c.l.b16 %v507
        %v697 = vunpack.c.h.b16 %v507
        %v698 = vunpack.c.l.b16 %v508
        %v699 = vunpack.c.h.b16 %v508
        %v700 = vunpack.c.l.b16 %v509
        %v701 = vunpack.c.h.b16 %v509
        %v702 = vunpack.c.l.b16 %v510
        %v703 = vunpack.c.h.b16 %v510
        %v704 = vunpack.c.l.b16 %v511
        %v705 = vunpack.c.h.b16 %v511
        %v706 = vunpack.c.l.b16 %v512
        %v707 = vunpack.c.h.b16 %v512
        %v708 = vunpack.c.l.b16 %v513
        %v709 = vunpack.c.h.b16 %v513
        %v710 = vunpack.c.l.b16 %v514
        %v711 = vunpack.c.h.b16 %v514
        %v712 = vunpack.c.l.b16 %v515
        %v713 = vunpack.c.h.b16 %v515
        %v714 = vunpack.c.l.b16 %v516
        %v715 = vunpack.c.h.b16 %v516
        %v716 = vunpack.c.l.b16 %v517
        %v717 = vunpack.c.h.b16 %v517
        %v718 = vunpack.c.l.b16 %v518
        %v719 = vunpack.c.h.b16 %v518
        %v720 = vunpack.c.l.b16 %v519
        %v721 = vunpack.c.h.b16 %v519
        %v722 = vunpack.c.l.b16 %v520
        %v723 = vunpack.c.h.b16 %v520
        %v724 = vunpack.c.l.b16 %v521
        %v725 = vunpack.c.h.b16 %v521
        %v726 = vunpack.c.l.b16 %v522
        %v727 = vunpack.c.h.b16 %v522
        %v728 = vunpack.c.l.b16 %v523
        %v729 = vunpack.c.h.b16 %v523
        %v730 = vunpack.c.l.b16 %v524
        %v731 = vunpack.c.h.b16 %v524
        %v732 = vunpack.c.l.b16 %v525
        %v733 = vunpack.c.h.b16 %v525
        %v734 = vunpack.c.l.b16 %v526
        %v735 = vunpack.c.h.b16 %v526
        %v736 = vunpack.c.l.b16 %v527
        %v737 = vunpack.c.h.b16 %v527
        %v738 = vunpack.c.l.b16 %v528
        %v739 = vunpack.c.h.b16 %v528
        %v740 = vunpack.c.l.b16 %v529
        %v741 = vunpack.c.h.b16 %v529
        %v742 = vunpack.c.l.b16 %v530
        %v743 = vunpack.c.h.b16 %v530
        %v744 = vunpack.c.l.b16 %v531
        %v745 = vunpack.c.h.b16 %v531
        %v746 = vunpack.c.l.b16 %v532
        %v747 = vunpack.c.h.b16 %v532
        %v748 = vunpack.c.l.b16 %v533
        %v749 = vunpack.c.h.b16 %v533
        %v750 = vunpack.c.l.b16 %v534
        %v751 = vunpack.c.h.b16 %v534
        %v752 = vunpack.c.l.b16 %v535
        %v753 = vunpack.c.h.b16 %v535
        %v754 = vunpack.c.l.b16 %v536
        %v755 = vunpack.c.h.b16 %v536
        %v756 = vunpack.c.l.b16 %v537
        %v757 = vunpack.c.h.b16 %v537
        %v758 = vunpack.c.l.b16 %v538
        %v759 = vunpack.c.h.b16 %v538
        %v760 = vunpack.c.l.b16 %v539
        %v761 = vunpack.c.h.b16 %v539
        %v762 = vunpack.c.l.b16 %v540
        %v763 = vunpack.c.h.b16 %v540
        %v764 = vunpack.c.l.b16 %v541
        %v765 = vunpack.c.h.b16 %v541
        %v766 = vpack.c.b16 %v640, %v638
        %v767 = vpack.c.b16 %v641, %v639
        %v768 = vpack.c.b16 %v644, %v642
        %v769 = vpack.c.b16 %v645, %v643
        %v770 = vpack.c.b16 %v648, %v646
        %v771 = vpack.c.b16 %v649, %v647
        %v772 = vpack.c.b16 %v652, %v650
        %v773 = vpack.c.b16 %v653, %v651
        %v774 = vpack.c.b16 %v656, %v654
        %v775 = vpack.c.b16 %v657, %v655
        %v776 = vpack.c.b16 %v660, %v658
        %v777 = vpack.c.b16 %v661, %v659
        %v778 = vpack.c.b16 %v664, %v662
        %v779 = vpack.c.b16 %v665, %v663
        %v780 = vpack.c.b16 %v668, %v666
        %v781 = vpack.c.b16 %v669, %v667
        %v782 = vpack.c.b16 %v672, %v670
        %v783 = vpack.c.b16 %v673, %v671
        %v784 = vpack.c.b16 %v676, %v674
        %v785 = vpack.c.b16 %v677, %v675
        %v786 = vpack.c.b16 %v680, %v678
        %v787 = vpack.c.b16 %v681, %v679
        %v788 = vpack.c.b16 %v684, %v682
        %v789 = vpack.c.b16 %v685, %v683
        %v790 = vpack.c.b16 %v688, %v686
        %v791 = vpack.c.b16 %v689, %v687
        %v792 = vpack.c.b16 %v692, %v690
        %v793 = vpack.c.b16 %v693, %v691
        %v794 = vpack.c.b16 %v696, %v694
        %v795 = vpack.c.b16 %v697, %v695
        %v796 = vpack.c.b16 %v700, %v698
        %v797 = vpack.c.b16 %v701, %v699
        %v798 = vpack.c.b16 %v704, %v702
        %v799 = vpack.c.b16 %v705, %v703
        %v800 = vpack.c.b16 %v708, %v706
        %v801 = vpack.c.b16 %v709, %v707
        %v802 = vpack.c.b16 %v712, %v710
        %v803 = vpack.c.b16 %v713, %v711
        %v804 = vpack.c.b16 %v716, %v714
        %v805 = vpack.c.b16 %v717, %v715
        %v806 = vpack.c.b16 %v720, %v718
        %v807 = vpack.c.b16 %v721, %v719
        %v808 = vpack.c.b16 %v724, %v722
        %v809 = vpack.c.b16 %v725, %v723
        %v810 = vpack.c.b16 %v728, %v726
        %v811 = vpack.c.b16 %v729, %v727
        %v812 = vpack.c.b16 %v732, %v730
        %v813 = vpack.c.b16 %v733, %v731
        %v814 = vpack.c.b16 %v736, %v734
        %v815 = vpack.c.b16 %v737, %v735
        %v816 = vpack.c.b16 %v740, %v738
        %v817 = vpack.c.b16 %v741, %v739
        %v818 = vpack.c.b16 %v744, %v742
        %v819 = vpack.c.b16 %v745, %v743
        %v820 = vpack.c.b16 %v748, %v746
        %v821 = vpack.c.b16 %v749, %v747
        %v822 = vpack.c.b16 %v752, %v750
        %v823 = vpack.c.b16 %v753, %v751
        %v824 = vpack.c.b16 %v756, %v754
        %v825 = vpack.c.b16 %v757, %v755
        %v826 = vpack.c.b16 %v760, %v758
        %v827 = vpack.c.b16 %v761, %v759
        %v828 = vpack.c.b16 %v764, %v762
        %v829 = vpack.c.b16 %v765, %v763
        %894 = vmatprep.subr.bf16.mxu0 %v781
        %895 = vmatpush1.bf16.msra.mxu0 %v780
        %896 = vmatprep.subr.bf16.mxu0 %v779
        %897 = vmatpush1.bf16.msra.mxu0 %v778
        %898 = vmatprep.subr.bf16.mxu0 %v777
        %899 = vmatpush1.bf16.msra.mxu0 %v776
        %900 = vmatprep.subr.bf16.mxu0 %v775
        %901 = vmatpush1.bf16.msra.mxu0 %v774
        %902 = vmatprep.subr.bf16.mxu0 %v773
        %903 = vmatpush1.bf16.msra.mxu0 %v772
        %904 = vmatprep.subr.bf16.mxu0 %v771
        %905 = vmatpush1.bf16.msra.mxu0 %v770
        %906 = vmatprep.subr.bf16.mxu0 %v769
        %907 = vmatpush1.bf16.msra.mxu0 %v768
        %908 = vmatprep.subr.bf16.mxu0 %v767
        %909 = vmatpush1.bf16.msra.mxu0 %v766
        %910 = vmatprep.subr.bf16.mxu0 %v797
        %911 = vmatpush2.bf16.msra.mxu0 %v796
        %912 = vmatprep.subr.bf16.mxu0 %v795
        %913 = vmatpush2.bf16.msra.mxu0 %v794
        %914 = vmatprep.subr.bf16.mxu0 %v793
        %915 = vmatpush2.bf16.msra.mxu0 %v792
        %916 = vmatprep.subr.bf16.mxu0 %v791
        %917 = vmatpush2.bf16.msra.mxu0 %v790
        %918 = vmatprep.subr.bf16.mxu0 %v789
        %919 = vmatpush2.bf16.msra.mxu0 %v788
        %920 = vmatprep.subr.bf16.mxu0 %v787
        %921 = vmatpush2.bf16.msra.mxu0 %v786
        %922 = vmatprep.subr.bf16.mxu0 %v785
        %923 = vmatpush2.bf16.msra.mxu0 %v784
        %924 = vmatprep.subr.bf16.mxu0 %v783
        %925 = vmatpush2.bf16.msra.mxu0 %v782
        %926 = vmatprep.mubr.bf16.mxu0 %v567
        %927 = vmatmul.mubr.bf16.gmra.mxu0 %v566
        %v928 = vpop.f32.mrf.mxu0
        %v929 = vadd.f32 %v547, %v928
        %v930 = vpop.f32.mrf.mxu0
        %v931 = vadd.f32 %v551, %v930
        %v932 = vpop.f32.mrf.mxu0
        %v933 = vadd.f32 %v547, %v932
        %v934 = vpop.f32.mrf.mxu0
        %v935 = vadd.f32 %v551, %v934
        %936 = vdwg.mxu0
        %937 = vmatprep.subr.bf16.mxu0 %v813
        %938 = vmatpush1.bf16.msra.mxu0 %v812
        %939 = vmatprep.subr.bf16.mxu0 %v811
        %940 = vmatpush1.bf16.msra.mxu0 %v810
        %941 = vmatprep.subr.bf16.mxu0 %v809
        %942 = vmatpush1.bf16.msra.mxu0 %v808
        %943 = vmatprep.subr.bf16.mxu0 %v807
        %944 = vmatpush1.bf16.msra.mxu0 %v806
        %945 = vmatprep.subr.bf16.mxu0 %v805
        %946 = vmatpush1.bf16.msra.mxu0 %v804
        %947 = vmatprep.subr.bf16.mxu0 %v803
        %948 = vmatpush1.bf16.msra.mxu0 %v802
        %949 = vmatprep.subr.bf16.mxu0 %v801
        %950 = vmatpush1.bf16.msra.mxu0 %v800
        %951 = vmatprep.subr.bf16.mxu0 %v799
        %952 = vmatpush1.bf16.msra.mxu0 %v798
        %953 = vmatprep.subr.bf16.mxu0 %v829
        %954 = vmatpush2.bf16.msra.mxu0 %v828
        %955 = vmatprep.subr.bf16.mxu0 %v827
        %956 = vmatpush2.bf16.msra.mxu0 %v826
        %957 = vmatprep.subr.bf16.mxu0 %v825
        %958 = vmatpush2.bf16.msra.mxu0 %v824
        %959 = vmatprep.subr.bf16.mxu0 %v823
        %960 = vmatpush2.bf16.msra.mxu0 %v822
        %961 = vmatprep.subr.bf16.mxu0 %v821
        %962 = vmatpush2.bf16.msra.mxu0 %v820
        %963 = vmatprep.subr.bf16.mxu0 %v819
        %964 = vmatpush2.bf16.msra.mxu0 %v818
        %965 = vmatprep.subr.bf16.mxu0 %v817
        %966 = vmatpush2.bf16.msra.mxu0 %v816
        %967 = vmatprep.subr.bf16.mxu0 %v815
        %968 = vmatpush2.bf16.msra.mxu0 %v814
        %969 = vmatprep.mubr.bf16.mxu0 %v569
        %970 = vmatmul.mubr.bf16.gmra.mxu0 %v568
        %v971 = vpop.f32.mrf.mxu0
        %v972 = vadd.f32 %v929, %v971
        %v973 = vpop.f32.mrf.mxu0
        %v974 = vadd.f32 %v931, %v973
        %v975 = vpop.f32.mrf.mxu0
        %v976 = vadd.f32 %v933, %v975
        %v977 = vpop.f32.mrf.mxu0
        %v978 = vadd.f32 %v935, %v977
        %979 = vdwg.mxu0
        %980 = vst [vmem:[%s466] sm:$0xff] %v972
        %981 = vst [vmem:[%s466 + $0x8] sm:$0xff] %v974
        %982 = vst [vmem:[%s466 + $0x10] sm:$0xff] %v976
        %983 = vst [vmem:[%s466 + $0x18] sm:$0xff] %v978
        %s984 = sand.u32 %s95, 1
        %s985 = sand.u32 %s95, 1
        %s986 = smul.addr %s985, 32
        %s987 = scalar_lea.vmem [#allocation3], %s986
        // Predicated region
        $region71: #{model_module_forward.1} parent=65 // pred_check
          %p988 = pneg %p105
        $region72: #{model_module_forward.1} parent=65 // pred_check_branch
          %990 = sbr.rel (%p988) target = $region74
        $region73: #{model_module_forward.1} parent=65 // pred_region
          %s991 = smul.u32 2, %s14
          %s992 = smul.addr %s991, 8
          %s993 = scalar_lea.vmem %s3, %s992
          // Predicated region
          $region75: #{model_module_forward.1} parent=73 // pred_check
            _
          $region76: #{model_module_forward.1} parent=73 // pred_check_branch
            %995 = sbr.rel (0) target = $region78
          $region77: #{model_module_forward.1} parent=73 // pred_region
            // Predicated region
            $region79: #{model_module_forward.1} parent=77 // pred_check
              _
            $region80: #{model_module_forward.1} parent=77 // pred_check_branch
              %997 = sbr.rel (0) target = $region82
            $region81: #{model_module_forward.1} parent=77 // pred_region
              loop: start=0, step=1, limit=1
              $region83: #{model_module_forward.1} parent=81 // loop_pre_header
                _
              $region84: #{model_module_forward.1} parent=81 // loop_header
                %s999 = sphi 0, %s1003
                %p1000 = scmp.ge.s32.totalorder %s999, 1
                %s1004 = sphi %s987, %s987
                %s1005 = sphi %s993, %s993
              $region85: #{model_module_forward.1} parent=81 // loop_header_branch
                %1002 = sbr.rel (%p1000) target = $region89
              $region86: #{model_module_forward.1} parent=81 // loop_body
                %v1006 = vld [vmem:[%s1004] sm:$0xff]
                %1007 = vst [vmem:[%s1005] sm:$0xff] %v1006
                %v1008 = vld [vmem:[%s1004 + $0x8] sm:$0xff]
                %1009 = vst [vmem:[%s1005 + $0x8] sm:$0xff] %v1008
                %v1010 = vld [vmem:[%s1004 + $0x10] sm:$0xff]
                %1011 = vst [vmem:[%s1005 + $0x20] sm:$0xff] %v1010
                %v1012 = vld [vmem:[%s1004 + $0x18] sm:$0xff]
                %1013 = vst [vmem:[%s1005 + $0x28] sm:$0xff] %v1012
              $region87: #{model_module_forward.1} parent=81 // loop_footer
                %s1003 = sadd.s32 1, %s999
              $region88: #{model_module_forward.1} parent=81 // loop_footer_branch
                %998 = sbr.rel target = $region84
              $region89: #{model_module_forward.1} parent=81 // loop_exit
                _
            $region82: #{model_module_forward.1} parent=77 // pred_fallthru
              _
            // Predicated region
            $region90: #{model_module_forward.1} parent=77 // pred_check
              _
            $region91: #{model_module_forward.1} parent=77 // pred_check_branch
              %1015 = sbr.rel target = $region93
            $region92: #{model_module_forward.1} parent=77 // pred_region
              _
            $region93: #{model_module_forward.1} parent=77 // pred_fallthru
              _
          $region78: #{model_module_forward.1} parent=73 // pred_fallthru
            _
          %1016 = vnop
        $region74: #{model_module_forward.1} parent=65 // pred_fallthru
          _
      $region66: #{model_module_forward.1} parent=5 // pred_fallthru
        _
      %p1017 = scmp.le.s32.totalorder 2, %s9
      // Predicated region
      $region94: #{model_module_forward.1} parent=5 // pred_check
        %p1018 = pneg %p1017
      $region95: #{model_module_forward.1} parent=5 // pred_check_branch
        %1020 = sbr.rel (%p1018) target = $region97
      $region96: #{model_module_forward.1} parent=5 // pred_region
        %s1021 = ssub.s32 %s9, 2
        // Predicated region
        $region98: #{model_module_forward.1} parent=96 // pred_check
          %p1022 = pneg %p111
        $region99: #{model_module_forward.1} parent=96 // pred_check_branch
          %1024 = sbr.rel (%p1022) target = $region101
        $region100: #{model_module_forward.1} parent=96 // pred_region
          %s1025 = sand.u32 %s96, 1
          %s1026 = sand.u32 %s96, 1
          %s1027 = smul.addr %s1026, 32
          %s1028 = scalar_lea.vmem [#allocation3], %s1027
        $region101: #{model_module_forward.1} parent=96 // pred_fallthru
          _
      $region97: #{model_module_forward.1} parent=5 // pred_fallthru
        _
    $region6: #{model_module_forward.1} parent=1 // loop_footer
      %s13 = sadd.s32 1, %s9
    $region7: #{model_module_forward.1} parent=1 // loop_footer_branch
      %8 = sbr.rel target = $region3
    $region8: #{model_module_forward.1} parent=1 // loop_exit
      _

</llo_original>
